<compile_context>
chip_gen: v7x
topology: tpu7x:2x2x1
jax: 0.10.0
libtpu: 0.0.40
codegen_flags: <defaults>
</compile_context>

<pallas_src>
import functools
import numpy as np
import jax
import jax.numpy as jnp
from jax.experimental import pallas as pl
from jax.experimental.pallas import tpu as pltpu


_ACTS = {
    "": lambda x: x,
    "ReLU": lambda x: jnp.maximum(x, 0.0),
    "Tanh": jnp.tanh,
    "Sigmoid": jax.nn.sigmoid,
    "GELU": jax.nn.gelu,
    "LeakyReLU": lambda x: jnp.where(x > 0, x, 0.01 * x),
}


def _fcnet_kernel(x_ref, *rest, num_layers, act):
    """Fused multi-layer (weight-normed Linear -> act) MLP on one row tile."""
    out_ref = rest[-1]
    wb_refs = rest[:-1]          # alternating (W^T, bias) refs, weight-norm pre-folded
    act_fn = _ACTS[act]

    h = x_ref[...].astype(jnp.float32)          # [TM, d0]
    for l in range(num_layers):                 # static Python loop over layers
        w_t = wb_refs[2 * l][...]               # [d_in, d_out] (resident in VMEM)
        b = wb_refs[2 * l + 1][...]             # [1, d_out]
        h = jnp.dot(h, w_t, preferred_element_type=jnp.float32) + b
        h = act_fn(h)
    out_ref[...] = h.astype(out_ref.dtype)


def _round_down(x, m):
    return (x // m) * m


def fcnet_forward(x, params, *, act="ReLU", row_tile=None):
    """FCNet forward.

    params: list (one per Linear) of dicts:
       'v': [out_dim, in_dim]  weight_norm direction tensor
       'g': scalar             weight_norm magnitude (dim=None -> scalar)
       'b': [out_dim]          bias
    Dropout layers are eval-mode identity.  # TODO(synk): training-mode dropout
    """
    f32 = jnp.float32
    dims = [params[0]["v"].shape[1]] + [p["v"].shape[0] for p in params]
    num_layers = len(params)
    d0, dL = dims[0], dims[-1]

    lead_shape = x.shape[:-1]
    R = int(np.prod(lead_shape)) if lead_shape else 1
    x2 = x.reshape(R, d0)

    # Fold the weight-norm scale (g / ||v||_F) into the transposed weight once.
    wb = []
    for p in params:
        v = p["v"].astype(f32)
        g = jnp.asarray(p["g"], f32)
        scale = g / jnp.sqrt(jnp.sum(v * v))
        wb.append(v.T * scale)                          # [d_in, d_out]
        wb.append(p["b"].astype(f32).reshape(1, -1))    # [1, d_out]

    # ---- Generation-aware row tiling -------------------------------------
    # Resident weights + double-buffered (x, out) tiles + fp32 intermediates
    # must fit scoped VMEM; keep >=50% headroom (v7x has only 64 MiB per TC).
    try:
        vmem_cap = int(pltpu.get_tpu_info().vmem_capacity_bytes)
    except Exception:
        vmem_cap = 64 * 1024 * 1024                     # conservative (v7x) default
    vmem_limit = min(vmem_cap // 2, 64 * 1024 * 1024)

    weight_bytes = sum(int(np.prod(w.shape)) * 4 for w in wb)
    bytes_per_elt = x2.dtype.itemsize
    # per-row VMEM cost: 2x-buffered in/out streams + fp32 intermediates of each layer
    per_row = 2 * (d0 * bytes_per_elt + dL * 4) + 4 * sum(dims)
    budget = max(vmem_limit - weight_bytes - (2 << 20), 1)

    if row_tile is None:
        tm = _round_down(budget // per_row, 8)
        # keep >=2 grid steps so pipelining (and v7x's 2 TCs) have work to overlap
        tm = min(tm, max(8, _round_down(max(R, 8) // 2, 8)), 1024)
        tm = max(tm, 8)
    else:
        tm = row_tile
    assert tm % 8 == 0, "row tile must be a multiple of 8 (f32 sublane)"

    R_pad = ((R + tm - 1) // tm) * tm
    if R_pad != R:
        x2 = jnp.pad(x2, ((0, R_pad - R), (0, 0)))
    grid = (R_pad // tm,)

    in_specs = [pl.BlockSpec((tm, d0), lambda i: (i, 0))]          # streamed rows
    for l in range(num_layers):
        din, dout = dims[l], dims[l + 1]
        in_specs.append(pl.BlockSpec((din, dout), lambda i: (0, 0)))   # resident W^T
        in_specs.append(pl.BlockSpec((1, dout), lambda i: (0, 0)))     # resident bias

    flops = 2 * R_pad * sum(dims[i] * dims[i + 1] for i in range(num_layers))
    bytes_accessed = R_pad * d0 * bytes_per_elt + R_pad * dL * 4 + weight_bytes

    kernel = functools.partial(_fcnet_kernel, num_layers=num_layers, act=act)
    out = pl.pallas_call(
        kernel,
        out_shape=jax.ShapeDtypeStruct((R_pad, dL), f32),
        grid_spec=pltpu.PrefetchScalarGridSpec(
            num_scalar_prefetch=0,
            grid=grid,
            in_specs=in_specs,
            out_specs=pl.BlockSpec((tm, dL), lambda i: (i, 0)),
        ),
        compiler_params=pltpu.CompilerParams(
            dimension_semantics=("parallel",),
            vmem_limit_bytes=vmem_limit,
        ),
        cost_estimate=pl.CostEstimate(
            flops=flops, transcendentals=0, bytes_accessed=bytes_accessed),
    )(x2, *wb)

    return out[:R].reshape(*lead_shape, dL)


def _reference(x, params, act="ReLU"):
    """Pure-JAX mirror of the PyTorch FCNet forward (eval mode)."""
    h = x.astype(jnp.float32)
    for p in params:
        v = p["v"].astype(jnp.float32)
        w_eff = p["g"] * v / jnp.sqrt(jnp.sum(v * v))     # weight_norm(dim=None)
        h = h @ w_eff.T + p["b"]
        h = _ACTS[act](h)
    return h


if __name__ == "__main__":
    # FCNet(dims=[32, 64, 48], act='ReLU', dropout=0.2) on a [2, 8, 32] input.
    B, S = 2, 8
    dims = [32, 64, 48]

    key = jax.random.PRNGKey(0)
    keys = jax.random.split(key, 1 + 3 * (len(dims) - 1))
    x = jax.random.normal(keys[0], (B, S, dims[0]), jnp.float32)

    params = []
    for l in range(len(dims) - 1):
        kv, kg, kb = keys[1 + 3 * l], keys[2 + 3 * l], keys[3 + 3 * l]
        v = 0.2 * jax.random.normal(kv, (dims[l + 1], dims[l]), jnp.float32)
        # torch's weight_norm init sets g = ||v||; perturb it so the fold is exercised.
        g = jnp.sqrt(jnp.sum(v * v)) * (1.0 + 0.1 * jax.random.normal(kg, ()))
        b = 0.1 * jax.random.normal(kb, (dims[l + 1],), jnp.float32)
        params.append({"v": v, "g": g, "b": b})

    out = fcnet_forward(x, params, act="ReLU")
    out = jax.block_until_ready(out)

    ref = _reference(x, params, act="ReLU")
    np.testing.assert_allclose(np.asarray(out), np.asarray(ref), rtol=1e-4, atol=1e-4)

    print("KERNEL_OK")
</pallas_src>

<mosaic_0001>
module attributes {stable_mosaic.version = 11 : i64} {
  func.func @_fcnet_kernel(%arg0: i32, %arg1: memref<8x32xf32, #tpu.memory_space<vmem>>, %arg2: memref<32x64xf32, #tpu.memory_space<vmem>>, %arg3: memref<1x64xf32, #tpu.memory_space<vmem>>, %arg4: memref<64x48xf32, #tpu.memory_space<vmem>>, %arg5: memref<1x48xf32, #tpu.memory_space<vmem>>, %arg6: memref<8x48xf32, #tpu.memory_space<vmem>>) attributes {dimension_semantics = [#tpu.dimension_semantics<parallel>], iteration_bounds = array<i64: 2>, scalar_prefetch = 0 : i64, scratch_operands = 0 : i64, tpu.core_type = #tpu.core_type<tc>, window_params = [{transform_indices = @transform_0, window_bounds = array<i64: 8, 32>}, {pipeline_mode = #tpu.pipeline_mode<synchronous>, transform_indices = @transform_1, window_bounds = array<i64: 32, 64>}, {pipeline_mode = #tpu.pipeline_mode<synchronous>, transform_indices = @transform_2, window_bounds = array<i64: 1, 64>}, {pipeline_mode = #tpu.pipeline_mode<synchronous>, transform_indices = @transform_3, window_bounds = array<i64: 64, 48>}, {pipeline_mode = #tpu.pipeline_mode<synchronous>, transform_indices = @transform_4, window_bounds = array<i64: 1, 48>}, {transform_indices = @transform_5, window_bounds = array<i64: 8, 48>}]} {
    %c0 = arith.constant 0 : index
    %c0_0 = arith.constant 0 : index
    %0 = vector.load %arg1[%c0, %c0_0] : memref<8x32xf32, #tpu.memory_space<vmem>>, vector<8x32xf32>
    %c0_1 = arith.constant 0 : index
    %c0_2 = arith.constant 0 : index
    %1 = vector.load %arg2[%c0_1, %c0_2] : memref<32x64xf32, #tpu.memory_space<vmem>>, vector<32x64xf32>
    %c0_3 = arith.constant 0 : index
    %c0_4 = arith.constant 0 : index
    %2 = vector.load %arg3[%c0_3, %c0_4] : memref<1x64xf32, #tpu.memory_space<vmem>>, vector<1x64xf32>
    %cst = arith.constant dense<0.000000e+00> : vector<8x64xf32>
    %3 = tpu.matmul %0, %1, %cst {dimension_numbers = #tpu.dot_dimension_numbers<[1], [0], [0], [1], [0, 0, 1, 1], [], []>} : vector<8x32xf32>, vector<32x64xf32>, vector<8x64xf32> -> vector<8x64xf32>
    %4 = vector.broadcast %2 : vector<1x64xf32> to vector<8x64xf32>
    %5 = arith.addf %3, %4 : vector<8x64xf32>
    %cst_5 = arith.constant 0.000000e+00 : f32
    %6 = vector.broadcast %cst_5 : f32 to vector<8x64xf32>
    %7 = arith.maximumf %5, %6 : vector<8x64xf32>
    %c0_6 = arith.constant 0 : index
    %c0_7 = arith.constant 0 : index
    %8 = vector.load %arg4[%c0_6, %c0_7] : memref<64x48xf32, #tpu.memory_space<vmem>>, vector<64x48xf32>
    %c0_8 = arith.constant 0 : index
    %c0_9 = arith.constant 0 : index
    %9 = vector.load %arg5[%c0_8, %c0_9] : memref<1x48xf32, #tpu.memory_space<vmem>>, vector<1x48xf32>
    %cst_10 = arith.constant dense<0.000000e+00> : vector<8x48xf32>
    %10 = tpu.matmul %7, %8, %cst_10 {dimension_numbers = #tpu.dot_dimension_numbers<[1], [0], [0], [1], [0, 0, 1, 1], [], []>} : vector<8x64xf32>, vector<64x48xf32>, vector<8x48xf32> -> vector<8x48xf32>
    %11 = vector.broadcast %9 : vector<1x48xf32> to vector<8x48xf32>
    %12 = arith.addf %10, %11 : vector<8x48xf32>
    %cst_11 = arith.constant 0.000000e+00 : f32
    %13 = vector.broadcast %cst_11 : f32 to vector<8x48xf32>
    %14 = arith.maximumf %12, %13 : vector<8x48xf32>
    %c0_12 = arith.constant 0 : index
    %c0_13 = arith.constant 0 : index
    %15 = vector.load %arg6[%c0_12, %c0_13] : memref<8x48xf32, #tpu.memory_space<vmem>>, vector<8x48xf32>
    tpu.vector_store %arg6[%c0_12, %c0_13], %14 {strides = array<i32>} : memref<8x48xf32, #tpu.memory_space<vmem>>, vector<8x48xf32>,
    return
  }
  func.func @transform_0(%arg0: i32) -> (i32, i32) {
    %c0_i32 = arith.constant 0 : i32
    %c0_i32_0 = arith.constant 0 : i32
    return %arg0, %c0_i32 : i32, i32
  }
  func.func @transform_1(%arg0: i32) -> (i32, i32) {
    %c0_i32 = arith.constant 0 : i32
    %c0_i32_0 = arith.constant 0 : i32
    %c0_i32_1 = arith.constant 0 : i32
    return %c0_i32, %c0_i32_0 : i32, i32
  }
  func.func @transform_2(%arg0: i32) -> (i32, i32) {
    %c0_i32 = arith.constant 0 : i32
    %c0_i32_0 = arith.constant 0 : i32
    %c0_i32_1 = arith.constant 0 : i32
    return %c0_i32, %c0_i32_0 : i32, i32
  }
  func.func @transform_3(%arg0: i32) -> (i32, i32) {
    %c0_i32 = arith.constant 0 : i32
    %c0_i32_0 = arith.constant 0 : i32
    %c0_i32_1 = arith.constant 0 : i32
    return %c0_i32, %c0_i32_0 : i32, i32
  }
  func.func @transform_4(%arg0: i32) -> (i32, i32) {
    %c0_i32 = arith.constant 0 : i32
    %c0_i32_0 = arith.constant 0 : i32
    %c0_i32_1 = arith.constant 0 : i32
    return %c0_i32, %c0_i32_0 : i32, i32
  }
  func.func @transform_5(%arg0: i32) -> (i32, i32) {
    %c0_i32 = arith.constant 0 : i32
    %c0_i32_0 = arith.constant 0 : i32
    return %arg0, %c0_i32 : i32, i32
  }
}

</mosaic_0001>

<llo_original>
// kernel: tpu_custom_call.1
$region0: #{tpu_custom_call.1}
  #allocation0 [shape = 'u32[]', space=smem, size = 0x4, offset = 0x4, fixed_abs, tag = 'smem constant byte address 0x4 - core index']
  #allocation1 [shape = 'u32[144,128]{1,0:T(1,128)}', space=vmem, size = 0x12000, scoped, tag = 'internal scratch']
  %s0 = inlined_call_operand.vmem [shape: f32[16,32], index: 0, kind: input, shape index: {}]
  %s1 = inlined_call_operand.vmem [shape: f32[32,64], index: 1, kind: input, shape index: {}]
  %s2 = inlined_call_operand.vmem [shape: f32[1,64], index: 2, kind: input, shape index: {}]
  %s3 = inlined_call_operand.vmem [shape: f32[64,48], index: 3, kind: input, shape index: {}]
  %s4 = inlined_call_operand.vmem [shape: f32[1,48], index: 4, kind: input, shape index: {}]
  %s5 = inlined_call_operand.hbm [shape: f32[16,48], index: 5, kind: output, shape index: {}]
  %s6 = sld [smem:[#allocation0]]
  $region53: #{tpu_custom_call.1} parent=0
    _
  %s8 = ssub.s32 1, %s6
  %s9 = scalar_select 0, %s8, %s6
  $region1: #{tpu_custom_call.1} parent=0
    #allocation2 [shape = 'u8[8192]{0}', space=vmem, size = 0x2000, scoped, tag = 'output window, operand 0']
    #allocation3 [shape = 's32[2]{0}', space=sflag, size = 0x8, scoped, tag = 'scoped memory for tpu_custom_call.1']
    %10 = vsyncpa [#allocation3], 0
    %s11 = scalar_lea.sflag [#allocation3], 1
    %12 = vsyncpa %s11, 0
    loop: start=0, step=1, limit=4
    $region2: #{tpu_custom_call.1} parent=1 // loop_pre_header
      _
    $region3: #{tpu_custom_call.1} parent=1 // loop_header
      %s14 = sphi 0, %s18
      %p15 = scmp.ge.s32.totalorder %s14, 4
      %s24 = sphi 0, %s26
      %s27 = sphi 0, %s24
      %s28 = sphi 0, %s27
      %s44 = sphi 0, %s28
      %s48 = sphi 0, %s48
      %s50 = sphi 0, %s48
      %s51 = sphi 0, %s50
      %s65 = sphi 0, %s51
      %s69 = sphi 0, %s69
      %s71 = sphi 0, %s69
      %s72 = sphi 0, %s71
      %s86 = sphi 0, %s72
      %s90 = sphi 0, %s90
      %s92 = sphi 0, %s90
      %s93 = sphi 0, %s92
      %s107 = sphi 0, %s93
      %s111 = sphi 0, %s111
      %s113 = sphi 0, %s111
      %s114 = sphi 0, %s113
      %s128 = sphi 0, %s114
      %s134 = sphi 0, %s136
      %s137 = sphi 0, %s134
      %s138 = sphi 0, %s137
      %s154 = sphi 0, %s138
    $region4: #{tpu_custom_call.1} parent=1 // loop_header_branch
      %17 = sbr.rel (%p15) target = $region8
    $region5: #{tpu_custom_call.1} parent=1 // loop_body
      %s19 = ssub.s32 %s14, 1
      %s20 = ssub.s32 %s14, 2
      %s21 = sadd.s32 %s14, 1
      %s22 = ssub.s32 %s14, %s21
      %p23 = scmp.eq.s32.totalorder %s22, 0
      %s25 = sadd.s32 %s24, 1
      %s26 = scalar_select %p23, %s24, %s25
      %p29 = pneg %p23
      %p30 = scmp.eq.s32.totalorder %s14, 1
      %p31 = por %p29, %p30
      %p32 = scmp.ne.s32.totalorder %s24, %s27
      %p33 = scmp.eq.s32.totalorder %s14, 0
      %p34 = por %p32, %p33
      %p35 = scmp.ne.s32.totalorder %s24, %s27
      %p36 = scmp.eq.s32.totalorder %s19, 1
      %p37 = por %p35, %p36
      %p38 = scmp.ne.s32.totalorder %s27, %s28
      %p39 = scmp.eq.s32.totalorder %s19, 0
      %p40 = por %p38, %p39
      %p41 = scmp.ne.s32.totalorder %s27, %s28
      %p42 = scmp.eq.s32.totalorder %s20, 1
      %p43 = por %p41, %p42
      %p45 = scmp.ne.s32.totalorder %s28, %s44
      %p46 = scmp.eq.s32.totalorder %s20, 0
      %p47 = por %p45, %p46
      %s49 = sadd.s32 %s48, 1
      %p52 = scmp.eq.s32.totalorder %s14, 1
      %p53 = scmp.ne.s32.totalorder %s48, %s50
      %p54 = scmp.eq.s32.totalorder %s14, 0
      %p55 = por %p53, %p54
      %p56 = scmp.ne.s32.totalorder %s48, %s50
      %p57 = scmp.eq.s32.totalorder %s19, 1
      %p58 = por %p56, %p57
      %p59 = scmp.ne.s32.totalorder %s50, %s51
      %p60 = scmp.eq.s32.totalorder %s19, 0
      %p61 = por %p59, %p60
      %p62 = scmp.ne.s32.totalorder %s50, %s51
      %p63 = scmp.eq.s32.totalorder %s20, 1
      %p64 = por %p62, %p63
      %p66 = scmp.ne.s32.totalorder %s51, %s65
      %p67 = scmp.eq.s32.totalorder %s20, 0
      %p68 = por %p66, %p67
      %s70 = sadd.s32 %s69, 1
      %p73 = scmp.eq.s32.totalorder %s14, 1
      %p74 = scmp.ne.s32.totalorder %s69, %s71
      %p75 = scmp.eq.s32.totalorder %s14, 0
      %p76 = por %p74, %p75
      %p77 = scmp.ne.s32.totalorder %s69, %s71
      %p78 = scmp.eq.s32.totalorder %s19, 1
      %p79 = por %p77, %p78
      %p80 = scmp.ne.s32.totalorder %s71, %s72
      %p81 = scmp.eq.s32.totalorder %s19, 0
      %p82 = por %p80, %p81
      %p83 = scmp.ne.s32.totalorder %s71, %s72
      %p84 = scmp.eq.s32.totalorder %s20, 1
      %p85 = por %p83, %p84
      %p87 = scmp.ne.s32.totalorder %s72, %s86
      %p88 = scmp.eq.s32.totalorder %s20, 0
      %p89 = por %p87, %p88
      %s91 = sadd.s32 %s90, 1
      %p94 = scmp.eq.s32.totalorder %s14, 1
      %p95 = scmp.ne.s32.totalorder %s90, %s92
      %p96 = scmp.eq.s32.totalorder %s14, 0
      %p97 = por %p95, %p96
      %p98 = scmp.ne.s32.totalorder %s90, %s92
      %p99 = scmp.eq.s32.totalorder %s19, 1
      %p100 = por %p98, %p99
      %p101 = scmp.ne.s32.totalorder %s92, %s93
      %p102 = scmp.eq.s32.totalorder %s19, 0
      %p103 = por %p101, %p102
      %p104 = scmp.ne.s32.totalorder %s92, %s93
      %p105 = scmp.eq.s32.totalorder %s20, 1
      %p106 = por %p104, %p105
      %p108 = scmp.ne.s32.totalorder %s93, %s107
      %p109 = scmp.eq.s32.totalorder %s20, 0
      %p110 = por %p108, %p109
      %s112 = sadd.s32 %s111, 1
      %p115 = scmp.eq.s32.totalorder %s14, 1
      %p116 = scmp.ne.s32.totalorder %s111, %s113
      %p117 = scmp.eq.s32.totalorder %s14, 0
      %p118 = por %p116, %p117
      %p119 = scmp.ne.s32.totalorder %s111, %s113
      %p120 = scmp.eq.s32.totalorder %s19, 1
      %p121 = por %p119, %p120
      %p122 = scmp.ne.s32.totalorder %s113, %s114
      %p123 = scmp.eq.s32.totalorder %s19, 0
      %p124 = por %p122, %p123
      %p125 = scmp.ne.s32.totalorder %s113, %s114
      %p126 = scmp.eq.s32.totalorder %s20, 1
      %p127 = por %p125, %p126
      %p129 = scmp.ne.s32.totalorder %s114, %s128
      %p130 = scmp.eq.s32.totalorder %s20, 0
      %p131 = por %p129, %p130
      %s132 = ssub.s32 %s14, %s21
      %p133 = scmp.eq.s32.totalorder %s132, 0
      %s135 = sadd.s32 %s134, 1
      %s136 = scalar_select %p133, %s134, %s135
      %p139 = pneg %p133
      %p140 = scmp.eq.s32.totalorder %s14, 1
      %p141 = por %p139, %p140
      %p142 = scmp.ne.s32.totalorder %s134, %s137
      %p143 = scmp.eq.s32.totalorder %s14, 0
      %p144 = por %p142, %p143
      %p145 = scmp.ne.s32.totalorder %s134, %s137
      %p146 = scmp.eq.s32.totalorder %s19, 1
      %p147 = por %p145, %p146
      %p148 = scmp.ne.s32.totalorder %s137, %s138
      %p149 = scmp.eq.s32.totalorder %s19, 0
      %p150 = por %p148, %p149
      %p151 = scmp.ne.s32.totalorder %s137, %s138
      %p152 = scmp.eq.s32.totalorder %s20, 1
      %p153 = por %p151, %p152
      %p155 = scmp.ne.s32.totalorder %s138, %s154
      %p156 = scmp.eq.s32.totalorder %s20, 0
      %p157 = por %p155, %p156
      %p158 = scmp.le.s32.totalorder 1, %s14
      %p159 = scmp.lt.s32.totalorder %s14, 3
      %p160 = pnand %p158, %p159
      %p161 = pneg %p160
      // Predicated region
      $region9: #{tpu_custom_call.1} parent=5 // pred_check
        _
      $region10: #{tpu_custom_call.1} parent=5 // pred_check_branch
        %163 = sbr.rel (%p160) target = $region12
      $region11: #{tpu_custom_call.1} parent=5 // pred_region
        %s164 = ssub.s32 %s14, 1
        // Predicated region
        $region13: #{tpu_custom_call.1} parent=11 // pred_check
          %p165 = pneg %p61
        $region14: #{tpu_custom_call.1} parent=11 // pred_check_branch
          %167 = sbr.rel (%p165) target = $region16
        $region15: #{tpu_custom_call.1} parent=11 // pred_region
          _
        $region16: #{tpu_custom_call.1} parent=11 // pred_fallthru
          _
        // Predicated region
        $region17: #{tpu_custom_call.1} parent=11 // pred_check
          %p168 = pneg %p82
        $region18: #{tpu_custom_call.1} parent=11 // pred_check_branch
          %170 = sbr.rel (%p168) target = $region20
        $region19: #{tpu_custom_call.1} parent=11 // pred_region
          _
        $region20: #{tpu_custom_call.1} parent=11 // pred_fallthru
          _
        // Predicated region
        $region21: #{tpu_custom_call.1} parent=11 // pred_check
          %p171 = pneg %p103
        $region22: #{tpu_custom_call.1} parent=11 // pred_check_branch
          %173 = sbr.rel (%p171) target = $region24
        $region23: #{tpu_custom_call.1} parent=11 // pred_region
          _
        $region24: #{tpu_custom_call.1} parent=11 // pred_fallthru
          _
        // Predicated region
        $region25: #{tpu_custom_call.1} parent=11 // pred_check
          %p174 = pneg %p124
        $region26: #{tpu_custom_call.1} parent=11 // pred_check_branch
          %176 = sbr.rel (%p174) target = $region28
        $region27: #{tpu_custom_call.1} parent=11 // pred_region
          _
        $region28: #{tpu_custom_call.1} parent=11 // pred_fallthru
          _
      $region12: #{tpu_custom_call.1} parent=5 // pred_fallthru
        _
      %p177 = scmp.lt.s32.totalorder %s14, 2
      // Predicated region
      $region29: #{tpu_custom_call.1} parent=5 // pred_check
        %p178 = pneg %p177
      $region30: #{tpu_custom_call.1} parent=5 // pred_check_branch
        %180 = sbr.rel (%p178) target = $region32
      $region31: #{tpu_custom_call.1} parent=5 // pred_region
        // Predicated region
        $region33: #{tpu_custom_call.1} parent=31 // pred_check
          %p181 = pneg %p34
        $region34: #{tpu_custom_call.1} parent=31 // pred_check_branch
          %183 = sbr.rel (%p181) target = $region36
        $region35: #{tpu_custom_call.1} parent=31 // pred_region
          %p184 = scmp.lt.s32.totalorder %s14, 1
          %s185 = scalar_select %p184, %s14, 1
          %s186 = smul.addr %s185, 8
          %s187 = scalar_lea.vmem %s0, %s186
        $region36: #{tpu_custom_call.1} parent=31 // pred_fallthru
          _
      $region32: #{tpu_custom_call.1} parent=5 // pred_fallthru
        _
      %p188 = scmp.le.s32.totalorder 1, %s14
      %p189 = scmp.lt.s32.totalorder %s14, 3
      %p190 = pnand %p188, %p189
      %p191 = pneg %p190
      // Predicated region
      $region37: #{tpu_custom_call.1} parent=5 // pred_check
        _
      $region38: #{tpu_custom_call.1} parent=5 // pred_check_branch
        %193 = sbr.rel (%p190) target = $region40
      $region39: #{tpu_custom_call.1} parent=5 // pred_region
        %s194 = ssub.s32 %s14, 1
        %p195 = scmp.lt.s32.totalorder %s19, 1
        %s196 = scalar_select %p195, %s19, 1
        %s197 = smul.addr %s196, 8
        %s198 = scalar_lea.vmem %s0, %s197
        %p199 = pneg %p40
        %p200 = pneg %p37
        %p201 = pneg %p61
        %p202 = pneg %p58
        %p203 = pneg %p82
        %p204 = pneg %p79
        %p205 = pneg %p103
        %p206 = pneg %p100
        %p207 = pneg %p124
        %p208 = pneg %p121
        %p209 = pneg %p150
        %p210 = pneg %p147
        %s211 = sand.u32 %s137, 1
        %s212 = scalar_lea.sflag [#allocation3], %s211
        %s213 = sand.u32 %s137, 1
        %s214 = smul.addr %s213, 8
        %s215 = scalar_lea.vmem [#allocation2], %s214
        %p216 = scmp.lt.s32.totalorder %s19, 1
        %s217 = scalar_select %p216, %s19, 1
        %s218 = smul.addr %s217, 8
        %s219 = scalar_lea.vmem %s0, %s218
        %v220 = vld [vmem:[%s219] sm:$0xff]
        %v221 = vld [vmem:[%s1] sm:$0xff]
        %v222 = vld [vmem:[%s1 + $0x8] sm:$0xff]
        %v223 = vld [vmem:[%s1 + $0x10] sm:$0xff]
        %v224 = vld [vmem:[%s1 + $0x18] sm:$0xff]
        %v225 = vld [vmem:[%s2] sm:$0x1]
        %v227 = vlaneseq
        %v228 = vshrl.u32 %v227, 7
        %v229 = vsub.s32 0, %v228
        %v230 = vrot.slane %v225, %v229
        %vm232 = vcmask 261120
        %v234 = vsel %vm232, %v220, 0
        %236 = vmatprep.subr.mxu0 0.0
        %237 = vmatpush1.msra.mxu0 %v221
        %238 = vmatprep.subr.mxu0 0.0
        %239 = vmatpush1.msra.mxu0 %v222
        %240 = vmatprep.subr.mxu0 0.0
        %241 = vmatpush1.msra.mxu0 %v223
        %242 = vmatprep.subr.mxu0 0.0
        %243 = vmatpush1.msra.mxu0 %v224
        %244 = vmatprep.subr.mxu0 0.0
        %245 = vmatpush1.msra.mxu0 0.0
        %246 = vmatprep.subr.mxu0 0.0
        %247 = vmatpush1.msra.mxu0 0.0
        %248 = vmatprep.subr.mxu0 0.0
        %249 = vmatpush1.msra.mxu0 0.0
        %250 = vmatprep.subr.mxu0 0.0
        %251 = vmatpush1.msra.mxu0 0.0
        %252 = vmatprep.subr.mxu0 0.0
        %253 = vmatpush1.msra.mxu0 0.0
        %254 = vmatprep.subr.mxu0 0.0
        %255 = vmatpush1.msra.mxu0 0.0
        %256 = vmatprep.subr.mxu0 0.0
        %257 = vmatpush1.msra.mxu0 0.0
        %258 = vmatprep.subr.mxu0 0.0
        %259 = vmatpush1.msra.mxu0 0.0
        %260 = vmatprep.subr.mxu0 0.0
        %261 = vmatpush1.msra.mxu0 0.0
        %262 = vmatprep.subr.mxu0 0.0
        %263 = vmatpush1.msra.mxu0 0.0
        %264 = vmatprep.subr.mxu0 0.0
        %265 = vmatpush1.msra.mxu0 0.0
        %266 = vmatprep.subr.mxu0 0.0
        %267 = vmatpush1.msra.mxu0 0.0
        %268 = vmatprep.subr.mxu0 0.0
        %269 = vmatpush1.msra.mxu0 0.0
        %270 = vmatprep.subr.mxu0 0.0
        %271 = vmatpush1.msra.mxu0 0.0
        %272 = vmatprep.subr.mxu0 0.0
        %273 = vmatpush1.msra.mxu0 0.0
        %274 = vmatprep.subr.mxu0 0.0
        %275 = vmatpush1.msra.mxu0 0.0
        %276 = vmatprep.subr.mxu0 0.0
        %277 = vmatpush1.msra.mxu0 0.0
        %278 = vmatprep.subr.mxu0 0.0
        %279 = vmatpush1.msra.mxu0 0.0
        %280 = vmatprep.subr.mxu0 0.0
        %281 = vmatpush1.msra.mxu0 0.0
        %282 = vmatprep.subr.mxu0 0.0
        %283 = vmatpush1.msra.mxu0 0.0
        %284 = vmatprep.subr.mxu0 0.0
        %285 = vmatpush1.msra.mxu0 0.0
        %286 = vmatprep.subr.mxu0 0.0
        %287 = vmatpush1.msra.mxu0 0.0
        %288 = vmatprep.subr.mxu0 0.0
        %289 = vmatpush1.msra.mxu0 0.0
        %290 = vmatprep.subr.mxu0 0.0
        %291 = vmatpush1.msra.mxu0 0.0
        %292 = vmatprep.subr.mxu0 0.0
        %293 = vmatpush1.msra.mxu0 0.0
        %294 = vmatprep.subr.mxu0 0.0
        %295 = vmatpush1.msra.mxu0 0.0
        %296 = vmatprep.subr.mxu0 0.0
        %297 = vmatpush1.msra.mxu0 0.0
        %298 = vmatprep.subr.mxu0 0.0
        %299 = vmatpush1.msra.mxu0 0.0
        %300 = vmatprep.mubr.f32.mxu0 0.0
        %301 = vmatmul.mubr.f32.gmra.mrb[0].mxu0 %v234
        %v302 = vpop.f32.mrb[0].mxu0
        %v303 = vadd.f32 %v230, %v302
        %v304 = vpop.f32.mrb[0].mxu0
        %305 = vdwg.mxu0
        %v306 = vmax.f32 %v303, 0.0
        %v307 = vld [vmem:[%s3] sm:$0xff]
        %v308 = vld [vmem:[%s3 + $0x8] sm:$0xff]
        %v309 = vld [vmem:[%s3 + $0x10] sm:$0xff]
        %v310 = vld [vmem:[%s3 + $0x18] sm:$0xff]
        %v311 = vld [vmem:[%s3 + $0x20] sm:$0xff]
        %v312 = vld [vmem:[%s3 + $0x28] sm:$0xff]
        %v313 = vld [vmem:[%s3 + $0x30] sm:$0xff]
        %v314 = vld [vmem:[%s3 + $0x38] sm:$0xff]
        %v315 = vld [vmem:[%s4] sm:$0x1]
        %v317 = vlaneseq
        %v318 = vshrl.u32 %v317, 7
        %v319 = vsub.s32 0, %v318
        %v320 = vrot.slane %v315, %v319
        %vm322 = vcmask 523264
        %v324 = vsel %vm322, %v306, 0
        %326 = vmatprep.subr.mxu0 0.0
        %327 = vmatpush1.msra.mxu0 %v307
        %328 = vmatprep.subr.mxu0 0.0
        %329 = vmatpush1.msra.mxu0 %v308
        %330 = vmatprep.subr.mxu0 0.0
        %331 = vmatpush1.msra.mxu0 %v309
        %332 = vmatprep.subr.mxu0 0.0
        %333 = vmatpush1.msra.mxu0 %v310
        %334 = vmatprep.subr.mxu0 0.0
        %335 = vmatpush1.msra.mxu0 %v311
        %336 = vmatprep.subr.mxu0 0.0
        %337 = vmatpush1.msra.mxu0 %v312
        %338 = vmatprep.subr.mxu0 0.0
        %339 = vmatpush1.msra.mxu0 %v313
        %340 = vmatprep.subr.mxu0 0.0
        %341 = vmatpush1.msra.mxu0 %v314
        %342 = vmatprep.subr.mxu0 0.0
        %343 = vmatpush1.msra.mxu0 0.0
        %344 = vmatprep.subr.mxu0 0.0
        %345 = vmatpush1.msra.mxu0 0.0
        %346 = vmatprep.subr.mxu0 0.0
        %347 = vmatpush1.msra.mxu0 0.0
        %348 = vmatprep.subr.mxu0 0.0
        %349 = vmatpush1.msra.mxu0 0.0
        %350 = vmatprep.subr.mxu0 0.0
        %351 = vmatpush1.msra.mxu0 0.0
        %352 = vmatprep.subr.mxu0 0.0
        %353 = vmatpush1.msra.mxu0 0.0
        %354 = vmatprep.subr.mxu0 0.0
        %355 = vmatpush1.msra.mxu0 0.0
        %356 = vmatprep.subr.mxu0 0.0
        %357 = vmatpush1.msra.mxu0 0.0
        %358 = vmatprep.subr.mxu0 0.0
        %359 = vmatpush1.msra.mxu0 0.0
        %360 = vmatprep.subr.mxu0 0.0
        %361 = vmatpush1.msra.mxu0 0.0
        %362 = vmatprep.subr.mxu0 0.0
        %363 = vmatpush1.msra.mxu0 0.0
        %364 = vmatprep.subr.mxu0 0.0
        %365 = vmatpush1.msra.mxu0 0.0
        %366 = vmatprep.subr.mxu0 0.0
        %367 = vmatpush1.msra.mxu0 0.0
        %368 = vmatprep.subr.mxu0 0.0
        %369 = vmatpush1.msra.mxu0 0.0
        %370 = vmatprep.subr.mxu0 0.0
        %371 = vmatpush1.msra.mxu0 0.0
        %372 = vmatprep.subr.mxu0 0.0
        %373 = vmatpush1.msra.mxu0 0.0
        %374 = vmatprep.subr.mxu0 0.0
        %375 = vmatpush1.msra.mxu0 0.0
        %376 = vmatprep.subr.mxu0 0.0
        %377 = vmatpush1.msra.mxu0 0.0
        %378 = vmatprep.subr.mxu0 0.0
        %379 = vmatpush1.msra.mxu0 0.0
        %380 = vmatprep.subr.mxu0 0.0
        %381 = vmatpush1.msra.mxu0 0.0
        %382 = vmatprep.subr.mxu0 0.0
        %383 = vmatpush1.msra.mxu0 0.0
        %384 = vmatprep.subr.mxu0 0.0
        %385 = vmatpush1.msra.mxu0 0.0
        %386 = vmatprep.subr.mxu0 0.0
        %387 = vmatpush1.msra.mxu0 0.0
        %388 = vmatprep.subr.mxu0 0.0
        %389 = vmatpush1.msra.mxu0 0.0
        %390 = vmatprep.mubr.f32.mxu0 0.0
        %391 = vmatmul.mubr.f32.gmra.mrb[0].mxu0 %v324
        %v392 = vpop.f32.mrb[0].mxu0
        %v393 = vadd.f32 %v320, %v392
        %v394 = vpop.f32.mrb[0].mxu0
        %395 = vdwg.mxu0
        %v396 = vmax.f32 %v393, 0.0
        %vm397 = vcmask 392192
        %398 = vst.msk [vmem:[%s215] sm:$0xff] %vm397, %v396
        %s399 = sand.u32 %s137, 1
        %s400 = scalar_lea.sflag [#allocation3], %s399
        %s401 = sand.u32 %s137, 1
        %s402 = smul.addr %s401, 8
        %s403 = scalar_lea.vmem [#allocation2], %s402
        // Predicated region
        $region41: #{tpu_custom_call.1} parent=39 // pred_check
          %p404 = pneg %p147
        $region42: #{tpu_custom_call.1} parent=39 // pred_check_branch
          %406 = sbr.rel (%p404) target = $region44
        $region43: #{tpu_custom_call.1} parent=39 // pred_region
          %s408 = ssub.s32 128, 128
          %409 = vsyncadd %s400, %s408
          %s410 = smul.addr %s19, 128
          %s411 = scalar_lea.hbm %s5, %s410
          %s413 = sshll.u32 %s403, 4
          %s414 = int_to_ptr.vmem [resolvable:$true] %s413
          %416 = dma.vmem_to_hbm [thread:$0]  %s414, 128, %s411, %s400
        $region44: #{tpu_custom_call.1} parent=39 // pred_fallthru
          _
      $region40: #{tpu_custom_call.1} parent=5 // pred_fallthru
        _
      %p417 = scmp.le.s32.totalorder 2, %s14
      // Predicated region
      $region45: #{tpu_custom_call.1} parent=5 // pred_check
        %p418 = pneg %p417
      $region46: #{tpu_custom_call.1} parent=5 // pred_check_branch
        %420 = sbr.rel (%p418) target = $region48
      $region47: #{tpu_custom_call.1} parent=5 // pred_region
        %s421 = ssub.s32 %s14, 2
        // Predicated region
        $region49: #{tpu_custom_call.1} parent=47 // pred_check
          %p422 = pneg %p153
        $region50: #{tpu_custom_call.1} parent=47 // pred_check_branch
          %424 = sbr.rel (%p422) target = $region52
        $region51: #{tpu_custom_call.1} parent=47 // pred_region
          %s425 = sand.u32 %s138, 1
          %s426 = scalar_lea.sflag [#allocation3], %s425
          %s427 = sand.u32 %s138, 1
          %s428 = smul.addr %s427, 8
          %s429 = scalar_lea.vmem [#allocation2], %s428
          %430 = dma.done %s426, 128
        $region52: #{tpu_custom_call.1} parent=47 // pred_fallthru
          _
      $region48: #{tpu_custom_call.1} parent=5 // pred_fallthru
        _
    $region6: #{tpu_custom_call.1} parent=1 // loop_footer
      %s18 = sadd.s32 1, %s14
    $region7: #{tpu_custom_call.1} parent=1 // loop_footer_branch
      %13 = sbr.rel target = $region3
    $region8: #{tpu_custom_call.1} parent=1 // loop_exit
      _
    %431 = vsyncpa [#allocation3], 1
    %s432 = scalar_lea.sflag [#allocation3], 1
    %433 = vsyncpa %s432, 1

</llo_original>
